<compile_context>
chip_gen: v7x
topology: tpu7x:2x2x1
jax: 0.10.0
libtpu: 0.0.40
codegen_flags: <defaults>
</compile_context>

<pallas_src>
import functools

import jax
import jax.numpy as jnp
from jax.experimental import pallas as pl
from jax.experimental.pallas import tpu as pltpu

d_ff = 64
d_model = 256


def _round_up(n, k):
    return ((n + k - 1) // k) * k


def _ffn_kernel(x_ref, w1_ref, b1_ref, w2_ref, b2_ref, o_ref):
    # x_ref:  (tm, d_model)        bf16
    # w1_ref: (d_model, d_ff_pad)  bf16   b1_ref: (1, d_ff_pad) f32
    # w2_ref: (d_ff_pad, d_model)  bf16   b2_ref: (1, d_model)  f32
    # o_ref:  (tm, d_model)        f32
    b1 = b1_ref[...]                       # read biases once (hoisted broadcast)
    b2 = b2_ref[...]
    h = jnp.dot(x_ref[...], w1_ref[...],
                preferred_element_type=jnp.float32) + b1
    h = jnp.maximum(h, 0.0)                # ReLU in f32 (VPU work hides under MXU)
    # dropout: identity in inference mode
    y = jnp.dot(h.astype(w2_ref.dtype), w2_ref[...],
                preferred_element_type=jnp.float32) + b2
    o_ref[...] = y.astype(o_ref.dtype)


@functools.partial(jax.jit, static_argnames=("tm",))
def positionwise_ffn(x, w1t, b1, w2t, b2, *, tm=512):
    """x: [batch, seq, d_model] -> [batch, seq, d_model]."""
    b, s, dm = x.shape
    m = b * s
    dff = w1t.shape[1]
    compute_dtype = jnp.bfloat16

    # Lane-dense intermediate: zero-pad d_ff up to a multiple of 128.
    # Padded h columns are relu(0 + 0) = 0 and the padded W2t rows are 0,
    # so the result is unchanged.
    dff_p = max(128, _round_up(dff, 128))
    w1t_p = jnp.zeros((dm, dff_p), w1t.dtype).at[:, :dff].set(w1t)
    b1_p = jnp.zeros((1, dff_p), jnp.float32).at[:, :dff].set(b1.astype(jnp.float32))
    w2t_p = jnp.zeros((dff_p, dm), w2t.dtype).at[:dff, :].set(w2t)
    b2_p = b2.astype(jnp.float32).reshape(1, dm)

    # Adaptive row tile: big tiles for big M, shrink for toy inputs; pad M up
    # to a multiple of the tile and slice the padding off at the end.
    tm_eff = min(tm, _round_up(m, 8))
    m_p = _round_up(m, tm_eff)
    x2d = x.reshape(m, dm)
    if m_p != m:
        x2d = jnp.pad(x2d, ((0, m_p - m), (0, 0)))

    out2d = pl.pallas_call(
        _ffn_kernel,
        out_shape=jax.ShapeDtypeStruct((m_p, dm), x.dtype),
        grid_spec=pltpu.PrefetchScalarGridSpec(
            num_scalar_prefetch=0,
            grid=(m_p // tm_eff,),
            in_specs=[
                pl.BlockSpec((tm_eff, dm), lambda i: (i, 0)),    # x rows
                pl.BlockSpec((dm, dff_p), lambda i: (0, 0)),     # W1^T (resident)
                pl.BlockSpec((1, dff_p), lambda i: (0, 0)),      # b1   (resident)
                pl.BlockSpec((dff_p, dm), lambda i: (0, 0)),     # W2^T (resident)
                pl.BlockSpec((1, dm), lambda i: (0, 0)),         # b2   (resident)
            ],
            out_specs=pl.BlockSpec((tm_eff, dm), lambda i: (i, 0)),
        ),
        compiler_params=pltpu.CompilerParams(
            dimension_semantics=("parallel",),   # M axis shards across TCs on v7x
            vmem_limit_bytes=32 * 1024 * 1024,   # safe on v5e/v6e/v7x; tiles + weights << 32 MiB
        ),
    )(x2d.astype(compute_dtype),
      w1t_p.astype(compute_dtype), b1_p,
      w2t_p.astype(compute_dtype), b2_p)

    return out2d[:m].reshape(b, s, dm)


def _ref_ffn_f32(x, w1t, b1, w2t, b2):
    h = jnp.maximum(x @ w1t + b1, 0.0)
    return h @ w2t + b2


def _ref_ffn_bf16(x, w1t, b1, w2t, b2):
    # Matches the kernel's arithmetic: bf16 operands, f32 accumulation/bias.
    h = jnp.dot(x.astype(jnp.bfloat16), w1t.astype(jnp.bfloat16),
                preferred_element_type=jnp.float32) + b1.astype(jnp.float32)
    h = jnp.maximum(h, 0.0)
    y = jnp.dot(h.astype(jnp.bfloat16), w2t.astype(jnp.bfloat16),
                preferred_element_type=jnp.float32) + b2.astype(jnp.float32)
    return y


if __name__ == "__main__":
    key = jax.random.PRNGKey(0)
    k_x, k_w1, k_b1, k_w2, k_b2 = jax.random.split(key, 5)

    batch, seq = 2, 8
    x = jax.random.normal(k_x, (batch, seq, d_model), dtype=jnp.float32)

    # Deterministic parameter init (matches nn.Linear shapes; W stored transposed
    # relative to PyTorch's (out, in) so the kernel does x @ W^T directly).
    w1t = jax.random.uniform(k_w1, (d_model, d_ff), jnp.float32,
                             minval=-1.0, maxval=1.0) / jnp.sqrt(d_model)
    b1 = jax.random.uniform(k_b1, (d_ff,), jnp.float32,
                            minval=-1.0, maxval=1.0) / jnp.sqrt(d_model)
    w2t = jax.random.uniform(k_w2, (d_ff, d_model), jnp.float32,
                             minval=-1.0, maxval=1.0) / jnp.sqrt(d_ff)
    b2 = jax.random.uniform(k_b2, (d_model,), jnp.float32,
                            minval=-1.0, maxval=1.0) / jnp.sqrt(d_ff)

    out = positionwise_ffn(x, w1t, b1, w2t, b2)
    out = jax.block_until_ready(out)
    assert out.shape == (batch, seq, d_model)

    # Strict check vs a bf16-operand / f32-accumulate reference (same arithmetic).
    ref_bf16 = _ref_ffn_bf16(x, w1t, b1, w2t, b2)
    assert jnp.allclose(out, ref_bf16, atol=2e-3, rtol=2e-3), "mismatch vs bf16 reference"

    # Looser sanity check vs the exact f32 reference (bf16 operand rounding).
    ref_f32 = _ref_ffn_f32(x, w1t, b1, w2t, b2)
    assert jnp.allclose(out, ref_f32, atol=5e-2, rtol=5e-2), "mismatch vs f32 reference"

    print("KERNEL_OK")
</pallas_src>

<mosaic_0001>
module attributes {stable_mosaic.version = 11 : i64} {
  func.func @_ffn_kernel(%arg0: i32, %arg1: memref<16x256xbf16, #tpu.memory_space<vmem>>, %arg2: memref<256x128xbf16, #tpu.memory_space<vmem>>, %arg3: memref<1x128xf32, #tpu.memory_space<vmem>>, %arg4: memref<128x256xbf16, #tpu.memory_space<vmem>>, %arg5: memref<1x256xf32, #tpu.memory_space<vmem>>, %arg6: memref<16x256xf32, #tpu.memory_space<vmem>>) attributes {dimension_semantics = [#tpu.dimension_semantics<parallel>], iteration_bounds = array<i64: 1>, scalar_prefetch = 0 : i64, scratch_operands = 0 : i64, tpu.core_type = #tpu.core_type<tc>, window_params = [{transform_indices = @transform_0, window_bounds = array<i64: 16, 256>}, {pipeline_mode = #tpu.pipeline_mode<synchronous>, transform_indices = @transform_1, window_bounds = array<i64: 256, 128>}, {pipeline_mode = #tpu.pipeline_mode<synchronous>, transform_indices = @transform_2, window_bounds = array<i64: 1, 128>}, {pipeline_mode = #tpu.pipeline_mode<synchronous>, transform_indices = @transform_3, window_bounds = array<i64: 128, 256>}, {pipeline_mode = #tpu.pipeline_mode<synchronous>, transform_indices = @transform_4, window_bounds = array<i64: 1, 256>}, {transform_indices = @transform_5, window_bounds = array<i64: 16, 256>}]} {
    %c0 = arith.constant 0 : index
    %c0_0 = arith.constant 0 : index
    %0 = vector.load %arg3[%c0, %c0_0] : memref<1x128xf32, #tpu.memory_space<vmem>>, vector<1x128xf32>
    %c0_1 = arith.constant 0 : index
    %c0_2 = arith.constant 0 : index
    %1 = vector.load %arg5[%c0_1, %c0_2] : memref<1x256xf32, #tpu.memory_space<vmem>>, vector<1x256xf32>
    %c0_3 = arith.constant 0 : index
    %c0_4 = arith.constant 0 : index
    %2 = vector.load %arg1[%c0_3, %c0_4] : memref<16x256xbf16, #tpu.memory_space<vmem>>, vector<16x256xbf16>
    %c0_5 = arith.constant 0 : index
    %c0_6 = arith.constant 0 : index
    %3 = vector.load %arg2[%c0_5, %c0_6] : memref<256x128xbf16, #tpu.memory_space<vmem>>, vector<256x128xbf16>
    %cst = arith.constant dense<0.000000e+00> : vector<16x128xf32>
    %4 = tpu.matmul %2, %3, %cst {dimension_numbers = #tpu.dot_dimension_numbers<[1], [0], [0], [1], [0, 0, 1, 1], [], []>} : vector<16x256xbf16>, vector<256x128xbf16>, vector<16x128xf32> -> vector<16x128xf32>
    %5 = vector.broadcast %0 : vector<1x128xf32> to vector<16x128xf32>
    %6 = arith.addf %4, %5 : vector<16x128xf32>
    %cst_7 = arith.constant 0.000000e+00 : f32
    %7 = vector.broadcast %cst_7 : f32 to vector<16x128xf32>
    %8 = arith.maximumf %6, %7 : vector<16x128xf32>
    %9 = arith.truncf %8 : vector<16x128xf32> to vector<16x128xbf16>
    %c0_8 = arith.constant 0 : index
    %c0_9 = arith.constant 0 : index
    %10 = vector.load %arg4[%c0_8, %c0_9] : memref<128x256xbf16, #tpu.memory_space<vmem>>, vector<128x256xbf16>
    %cst_10 = arith.constant dense<0.000000e+00> : vector<16x256xf32>
    %11 = tpu.matmul %9, %10, %cst_10 {dimension_numbers = #tpu.dot_dimension_numbers<[1], [0], [0], [1], [0, 0, 1, 1], [], []>} : vector<16x128xbf16>, vector<128x256xbf16>, vector<16x256xf32> -> vector<16x256xf32>
    %12 = vector.broadcast %1 : vector<1x256xf32> to vector<16x256xf32>
    %13 = arith.addf %11, %12 : vector<16x256xf32>
    %c0_11 = arith.constant 0 : index
    %c0_12 = arith.constant 0 : index
    %14 = vector.load %arg6[%c0_11, %c0_12] : memref<16x256xf32, #tpu.memory_space<vmem>>, vector<16x256xf32>
    tpu.vector_store %arg6[%c0_11, %c0_12], %13 {strides = array<i32>} : memref<16x256xf32, #tpu.memory_space<vmem>>, vector<16x256xf32>,
    return
  }
  func.func @transform_0(%arg0: i32) -> (i32, i32) {
    %c0_i32 = arith.constant 0 : i32
    %c0_i32_0 = arith.constant 0 : i32
    return %arg0, %c0_i32 : i32, i32
  }
  func.func @transform_1(%arg0: i32) -> (i32, i32) {
    %c0_i32 = arith.constant 0 : i32
    %c0_i32_0 = arith.constant 0 : i32
    %c0_i32_1 = arith.constant 0 : i32
    return %c0_i32, %c0_i32_0 : i32, i32
  }
  func.func @transform_2(%arg0: i32) -> (i32, i32) {
    %c0_i32 = arith.constant 0 : i32
    %c0_i32_0 = arith.constant 0 : i32
    %c0_i32_1 = arith.constant 0 : i32
    return %c0_i32, %c0_i32_0 : i32, i32
  }
  func.func @transform_3(%arg0: i32) -> (i32, i32) {
    %c0_i32 = arith.constant 0 : i32
    %c0_i32_0 = arith.constant 0 : i32
    %c0_i32_1 = arith.constant 0 : i32
    return %c0_i32, %c0_i32_0 : i32, i32
  }
  func.func @transform_4(%arg0: i32) -> (i32, i32) {
    %c0_i32 = arith.constant 0 : i32
    %c0_i32_0 = arith.constant 0 : i32
    %c0_i32_1 = arith.constant 0 : i32
    return %c0_i32, %c0_i32_0 : i32, i32
  }
  func.func @transform_5(%arg0: i32) -> (i32, i32) {
    %c0_i32 = arith.constant 0 : i32
    %c0_i32_0 = arith.constant 0 : i32
    return %arg0, %c0_i32 : i32, i32
  }
}

</mosaic_0001>

<llo_original>
// kernel: positionwise_ffn.1
$region0: #{positionwise_ffn.1}
  #allocation0 [shape = 'u32[]', space=smem, size = 0x4, offset = 0x4, fixed_abs, tag = 'smem constant byte address 0x4 - core index']
  #allocation1 [shape = 'u32[144,128]{1,0:T(1,128)}', space=vmem, size = 0x12000, scoped, tag = 'internal scratch']
  %s0 = inlined_call_operand.vmem [shape: bf16[16,256], index: 0, kind: input, shape index: {}]
  %s1 = inlined_call_operand.vmem [shape: bf16[256,128], index: 1, kind: input, shape index: {}]
  %s2 = inlined_call_operand.vmem [shape: f32[1,128], index: 2, kind: input, shape index: {}]
  %s3 = inlined_call_operand.vmem [shape: bf16[128,256], index: 3, kind: input, shape index: {}]
  %s4 = inlined_call_operand.vmem [shape: f32[1,256], index: 4, kind: input, shape index: {}]
  %s5 = inlined_call_operand.hbm [shape: f32[16,256], index: 5, kind: output, shape index: {}]
  %s6 = sld [smem:[#allocation0]]
  $region30: #{positionwise_ffn.1} parent=0
    _
  %s8 = ssub.s32 1, %s6
  %s9 = scalar_select 0, %s8, %s6
  $region1: #{positionwise_ffn.1} parent=0
    #allocation2 [shape = 'u8[16384]{0}', space=vmem, size = 0x4000, scoped, tag = 'output window, operand 0, single buffered']
    #allocation3 [shape = 's32[1]{0}', space=sflag, size = 0x4, scoped, tag = 'scoped memory for positionwise_ffn.1']
    %10 = vsyncpa [#allocation3], 0
    // Predicated region
    $region2: #{positionwise_ffn.1} parent=1 // pred_check
      _
    $region3: #{positionwise_ffn.1} parent=1 // pred_check_branch
      %12 = sbr.rel (0) target = $region5
    $region4: #{positionwise_ffn.1} parent=1 // pred_region
      _
    $region5: #{positionwise_ffn.1} parent=1 // pred_fallthru
      _
    // Predicated region
    $region6: #{positionwise_ffn.1} parent=1 // pred_check
      _
    $region7: #{positionwise_ffn.1} parent=1 // pred_check_branch
      %14 = sbr.rel (0) target = $region9
    $region8: #{positionwise_ffn.1} parent=1 // pred_region
      _
    $region9: #{positionwise_ffn.1} parent=1 // pred_fallthru
      _
    // Predicated region
    $region10: #{positionwise_ffn.1} parent=1 // pred_check
      _
    $region11: #{positionwise_ffn.1} parent=1 // pred_check_branch
      %16 = sbr.rel (0) target = $region13
    $region12: #{positionwise_ffn.1} parent=1 // pred_region
      _
    $region13: #{positionwise_ffn.1} parent=1 // pred_fallthru
      _
    // Predicated region
    $region14: #{positionwise_ffn.1} parent=1 // pred_check
      _
    $region15: #{positionwise_ffn.1} parent=1 // pred_check_branch
      %18 = sbr.rel (0) target = $region17
    $region16: #{positionwise_ffn.1} parent=1 // pred_region
      _
    $region17: #{positionwise_ffn.1} parent=1 // pred_fallthru
      _
    // Predicated region
    $region18: #{positionwise_ffn.1} parent=1 // pred_check
      _
    $region19: #{positionwise_ffn.1} parent=1 // pred_check_branch
      %20 = sbr.rel (0) target = $region21
    $region20: #{positionwise_ffn.1} parent=1 // pred_region
      _
    $region21: #{positionwise_ffn.1} parent=1 // pred_fallthru
      _
    %v22 = vld [vmem:[%s2] sm:$0x1]
    %v23 = vld [vmem:[%s4] sm:$0x3]
    %v24 = vld [vmem:[%s0] sm:$0xff]
    %v25 = vld [vmem:[%s0 + $0x8] sm:$0xff]
    %v26 = vld [vmem:[%s1] sm:$0xf]
    %v27 = vld [vmem:[%s1 + $0x4] sm:$0xf]
    %v28 = vld [vmem:[%s1 + $0x8] sm:$0xf]
    %v29 = vld [vmem:[%s1 + $0xc] sm:$0xf]
    %v30 = vld [vmem:[%s1 + $0x10] sm:$0xf]
    %v31 = vld [vmem:[%s1 + $0x14] sm:$0xf]
    %v32 = vld [vmem:[%s1 + $0x18] sm:$0xf]
    %v33 = vld [vmem:[%s1 + $0x1c] sm:$0xf]
    %v34 = vld [vmem:[%s1 + $0x20] sm:$0xf]
    %v35 = vld [vmem:[%s1 + $0x24] sm:$0xf]
    %v36 = vld [vmem:[%s1 + $0x28] sm:$0xf]
    %v37 = vld [vmem:[%s1 + $0x2c] sm:$0xf]
    %v38 = vld [vmem:[%s1 + $0x30] sm:$0xf]
    %v39 = vld [vmem:[%s1 + $0x34] sm:$0xf]
    %v40 = vld [vmem:[%s1 + $0x38] sm:$0xf]
    %v41 = vld [vmem:[%s1 + $0x3c] sm:$0xf]
    %v42 = vld [vmem:[%s1 + $0x40] sm:$0xf]
    %v43 = vld [vmem:[%s1 + $0x44] sm:$0xf]
    %v44 = vld [vmem:[%s1 + $0x48] sm:$0xf]
    %v45 = vld [vmem:[%s1 + $0x4c] sm:$0xf]
    %v46 = vld [vmem:[%s1 + $0x50] sm:$0xf]
    %v47 = vld [vmem:[%s1 + $0x54] sm:$0xf]
    %v48 = vld [vmem:[%s1 + $0x58] sm:$0xf]
    %v49 = vld [vmem:[%s1 + $0x5c] sm:$0xf]
    %v50 = vld [vmem:[%s1 + $0x60] sm:$0xf]
    %v51 = vld [vmem:[%s1 + $0x64] sm:$0xf]
    %v52 = vld [vmem:[%s1 + $0x68] sm:$0xf]
    %v53 = vld [vmem:[%s1 + $0x6c] sm:$0xf]
    %v54 = vld [vmem:[%s1 + $0x70] sm:$0xf]
    %v55 = vld [vmem:[%s1 + $0x74] sm:$0xf]
    %v56 = vld [vmem:[%s1 + $0x78] sm:$0xf]
    %v57 = vld [vmem:[%s1 + $0x7c] sm:$0xf]
    %v59 = vlaneseq
    %v60 = vshrl.u32 %v59, 7
    %v61 = vsub.s32 0, %v60
    %v62 = vrot.slane %v22, %v61
    %v66 = vunpack.c.l.b16 %v24
    %v67 = vunpack.c.h.b16 %v24
    %v68 = vunpack.c.l.b16 %v25
    %v69 = vunpack.c.h.b16 %v25
    %v70 = vpack.c.b16 %v68, %v66
    %v71 = vpack.c.b16 %v69, %v67
    %v106 = vunpack.c.l.b16 %v26
    %v107 = vunpack.c.l.b16 %v27
    %v108 = vunpack.c.l.b16 %v28
    %v109 = vunpack.c.l.b16 %v29
    %v110 = vunpack.c.l.b16 %v30
    %v111 = vunpack.c.l.b16 %v31
    %v112 = vunpack.c.l.b16 %v32
    %v113 = vunpack.c.l.b16 %v33
    %v114 = vunpack.c.l.b16 %v34
    %v115 = vunpack.c.l.b16 %v35
    %v116 = vunpack.c.l.b16 %v36
    %v117 = vunpack.c.l.b16 %v37
    %v118 = vunpack.c.l.b16 %v38
    %v119 = vunpack.c.l.b16 %v39
    %v120 = vunpack.c.l.b16 %v40
    %v121 = vunpack.c.l.b16 %v41
    %v122 = vunpack.c.l.b16 %v42
    %v123 = vunpack.c.l.b16 %v43
    %v124 = vunpack.c.l.b16 %v44
    %v125 = vunpack.c.l.b16 %v45
    %v126 = vunpack.c.l.b16 %v46
    %v127 = vunpack.c.l.b16 %v47
    %v128 = vunpack.c.l.b16 %v48
    %v129 = vunpack.c.l.b16 %v49
    %v130 = vunpack.c.l.b16 %v50
    %v131 = vunpack.c.l.b16 %v51
    %v132 = vunpack.c.l.b16 %v52
    %v133 = vunpack.c.l.b16 %v53
    %v134 = vunpack.c.l.b16 %v54
    %v135 = vunpack.c.l.b16 %v55
    %v136 = vunpack.c.l.b16 %v56
    %v137 = vunpack.c.l.b16 %v57
    %v138 = vpack.c.b16 %v107, %v106
    %v139 = vpack.c.b16 %v109, %v108
    %v140 = vpack.c.b16 %v111, %v110
    %v141 = vpack.c.b16 %v113, %v112
    %v142 = vpack.c.b16 %v115, %v114
    %v143 = vpack.c.b16 %v117, %v116
    %v144 = vpack.c.b16 %v119, %v118
    %v145 = vpack.c.b16 %v121, %v120
    %v146 = vpack.c.b16 %v123, %v122
    %v147 = vpack.c.b16 %v125, %v124
    %v148 = vpack.c.b16 %v127, %v126
    %v149 = vpack.c.b16 %v129, %v128
    %v150 = vpack.c.b16 %v131, %v130
    %v151 = vpack.c.b16 %v133, %v132
    %v152 = vpack.c.b16 %v135, %v134
    %v153 = vpack.c.b16 %v137, %v136
    %170 = vmatprep.subr.bf16.mxu0 0
    %171 = vmatpush1.bf16.msra.mxu0 %v138
    %172 = vmatprep.subr.bf16.mxu0 0
    %173 = vmatpush1.bf16.msra.mxu0 %v139
    %174 = vmatprep.subr.bf16.mxu0 0
    %175 = vmatpush1.bf16.msra.mxu0 %v140
    %176 = vmatprep.subr.bf16.mxu0 0
    %177 = vmatpush1.bf16.msra.mxu0 %v141
    %178 = vmatprep.subr.bf16.mxu0 0
    %179 = vmatpush1.bf16.msra.mxu0 %v142
    %180 = vmatprep.subr.bf16.mxu0 0
    %181 = vmatpush1.bf16.msra.mxu0 %v143
    %182 = vmatprep.subr.bf16.mxu0 0
    %183 = vmatpush1.bf16.msra.mxu0 %v144
    %184 = vmatprep.subr.bf16.mxu0 0
    %185 = vmatpush1.bf16.msra.mxu0 %v145
    %186 = vmatprep.subr.bf16.mxu0 0
    %187 = vmatpush1.bf16.msra.mxu0 %v146
    %188 = vmatprep.subr.bf16.mxu0 0
    %189 = vmatpush1.bf16.msra.mxu0 %v147
    %190 = vmatprep.subr.bf16.mxu0 0
    %191 = vmatpush1.bf16.msra.mxu0 %v148
    %192 = vmatprep.subr.bf16.mxu0 0
    %193 = vmatpush1.bf16.msra.mxu0 %v149
    %194 = vmatprep.subr.bf16.mxu0 0
    %195 = vmatpush1.bf16.msra.mxu0 %v150
    %196 = vmatprep.subr.bf16.mxu0 0
    %197 = vmatpush1.bf16.msra.mxu0 %v151
    %198 = vmatprep.subr.bf16.mxu0 0
    %199 = vmatpush1.bf16.msra.mxu0 %v152
    %200 = vmatprep.subr.bf16.mxu0 0
    %201 = vmatpush1.bf16.msra.mxu0 %v153
    %202 = vmatprep.mubr.bf16.mxu0 %v71
    %203 = vmatmul.mubr.bf16.gmra.mrb[0].mxu0 %v70
    %v204 = vpop.f32.mrb[0].mxu0
    %v205 = vadd.f32 %v62, %v204
    %v206 = vpop.f32.mrb[0].mxu0
    %v207 = vpop.f32.mrb[0].mxu0
    %v208 = vadd.f32 %v62, %v207
    %v209 = vpop.f32.mrb[0].mxu0
    %210 = vdwg.mxu0
    %v211 = vmax.f32 %v205, 0.0
    %v212 = vmax.f32 %v208, 0.0
    %v213 = vpack.c.bf16 %v212, %v211
    %v214 = vld [vmem:[%s3] sm:$0xff]
    %v215 = vld [vmem:[%s3 + $0x8] sm:$0xff]
    %v216 = vld [vmem:[%s3 + $0x10] sm:$0xff]
    %v217 = vld [vmem:[%s3 + $0x18] sm:$0xff]
    %v218 = vld [vmem:[%s3 + $0x20] sm:$0xff]
    %v219 = vld [vmem:[%s3 + $0x28] sm:$0xff]
    %v220 = vld [vmem:[%s3 + $0x30] sm:$0xff]
    %v221 = vld [vmem:[%s3 + $0x38] sm:$0xff]
    %v222 = vld [vmem:[%s3 + $0x40] sm:$0xff]
    %v223 = vld [vmem:[%s3 + $0x48] sm:$0xff]
    %v224 = vld [vmem:[%s3 + $0x50] sm:$0xff]
    %v225 = vld [vmem:[%s3 + $0x58] sm:$0xff]
    %v226 = vld [vmem:[%s3 + $0x60] sm:$0xff]
    %v227 = vld [vmem:[%s3 + $0x68] sm:$0xff]
    %v228 = vld [vmem:[%s3 + $0x70] sm:$0xff]
    %v229 = vld [vmem:[%s3 + $0x78] sm:$0xff]
    %v231 = vlaneseq
    %v232 = vshrl.u32 %v231, 7
    %v233 = vsub.s32 0, %v232
    %v234 = vrot.slane %v23, %v233
    %v235 = vlaneseq
    %v236 = vshrl.u32 %v235, 7
    %v237 = vsub.s32 1, %v236
    %v238 = vrot.slane %v23, %v237
    %v257 = vunpack.c.l.b16 %v214
    %v258 = vunpack.c.h.b16 %v214
    %v259 = vunpack.c.l.b16 %v215
    %v260 = vunpack.c.h.b16 %v215
    %v261 = vunpack.c.l.b16 %v216
    %v262 = vunpack.c.h.b16 %v216
    %v263 = vunpack.c.l.b16 %v217
    %v264 = vunpack.c.h.b16 %v217
    %v265 = vunpack.c.l.b16 %v218
    %v266 = vunpack.c.h.b16 %v218
    %v267 = vunpack.c.l.b16 %v219
    %v268 = vunpack.c.h.b16 %v219
    %v269 = vunpack.c.l.b16 %v220
    %v270 = vunpack.c.h.b16 %v220
    %v271 = vunpack.c.l.b16 %v221
    %v272 = vunpack.c.h.b16 %v221
    %v273 = vunpack.c.l.b16 %v222
    %v274 = vunpack.c.h.b16 %v222
    %v275 = vunpack.c.l.b16 %v223
    %v276 = vunpack.c.h.b16 %v223
    %v277 = vunpack.c.l.b16 %v224
    %v278 = vunpack.c.h.b16 %v224
    %v279 = vunpack.c.l.b16 %v225
    %v280 = vunpack.c.h.b16 %v225
    %v281 = vunpack.c.l.b16 %v226
    %v282 = vunpack.c.h.b16 %v226
    %v283 = vunpack.c.l.b16 %v227
    %v284 = vunpack.c.h.b16 %v227
    %v285 = vunpack.c.l.b16 %v228
    %v286 = vunpack.c.h.b16 %v228
    %v287 = vunpack.c.l.b16 %v229
    %v288 = vunpack.c.h.b16 %v229
    %v289 = vpack.c.b16 %v259, %v257
    %v290 = vpack.c.b16 %v260, %v258
    %v291 = vpack.c.b16 %v263, %v261
    %v292 = vpack.c.b16 %v264, %v262
    %v293 = vpack.c.b16 %v267, %v265
    %v294 = vpack.c.b16 %v268, %v266
    %v295 = vpack.c.b16 %v271, %v269
    %v296 = vpack.c.b16 %v272, %v270
    %v297 = vpack.c.b16 %v275, %v273
    %v298 = vpack.c.b16 %v276, %v274
    %v299 = vpack.c.b16 %v279, %v277
    %v300 = vpack.c.b16 %v280, %v278
    %v301 = vpack.c.b16 %v283, %v281
    %v302 = vpack.c.b16 %v284, %v282
    %v303 = vpack.c.b16 %v287, %v285
    %v304 = vpack.c.b16 %v288, %v286
    %321 = vmatprep.subr.bf16.mxu0 %v290
    %322 = vmatpush1.bf16.msra.mxu0 %v289
    %323 = vmatprep.subr.bf16.mxu0 %v292
    %324 = vmatpush1.bf16.msra.mxu0 %v291
    %325 = vmatprep.subr.bf16.mxu0 %v294
    %326 = vmatpush1.bf16.msra.mxu0 %v293
    %327 = vmatprep.subr.bf16.mxu0 %v296
    %328 = vmatpush1.bf16.msra.mxu0 %v295
    %329 = vmatprep.subr.bf16.mxu0 %v298
    %330 = vmatpush1.bf16.msra.mxu0 %v297
    %331 = vmatprep.subr.bf16.mxu0 %v300
    %332 = vmatpush1.bf16.msra.mxu0 %v299
    %333 = vmatprep.subr.bf16.mxu0 %v302
    %334 = vmatpush1.bf16.msra.mxu0 %v301
    %335 = vmatprep.subr.bf16.mxu0 %v304
    %336 = vmatpush1.bf16.msra.mxu0 %v303
    %337 = vmatprep.subr.bf16.mxu0 0
    %338 = vmatpush1.bf16.msra.mxu0 0
    %339 = vmatprep.subr.bf16.mxu0 0
    %340 = vmatpush1.bf16.msra.mxu0 0
    %341 = vmatprep.subr.bf16.mxu0 0
    %342 = vmatpush1.bf16.msra.mxu0 0
    %343 = vmatprep.subr.bf16.mxu0 0
    %344 = vmatpush1.bf16.msra.mxu0 0
    %345 = vmatprep.subr.bf16.mxu0 0
    %346 = vmatpush1.bf16.msra.mxu0 0
    %347 = vmatprep.subr.bf16.mxu0 0
    %348 = vmatpush1.bf16.msra.mxu0 0
    %349 = vmatprep.subr.bf16.mxu0 0
    %350 = vmatpush1.bf16.msra.mxu0 0
    %351 = vmatprep.subr.bf16.mxu0 0
    %352 = vmatpush1.bf16.msra.mxu0 0
    %353 = vmatprep.mubr.bf16.mxu0 0
    %354 = vmatmul.mubr.bf16.gmra.mrb[0].mxu0 %v213
    %v355 = vpop.f32.mrb[0].mxu0
    %v356 = vadd.f32 %v234, %v355
    %v357 = vpop.f32.mrb[0].mxu0
    %v358 = vadd.f32 %v238, %v357
    %v359 = vpop.f32.mrb[0].mxu0
    %v360 = vadd.f32 %v234, %v359
    %v361 = vpop.f32.mrb[0].mxu0
    %v362 = vadd.f32 %v238, %v361
    %363 = vdwg.mxu0
    %364 = vst [vmem:[#allocation2] sm:$0xff] %v356
    %365 = vst [vmem:[#allocation2 + $0x8] sm:$0xff] %v358
    %366 = vst [vmem:[#allocation2 + $0x10] sm:$0xff] %v360
    %367 = vst [vmem:[#allocation2 + $0x18] sm:$0xff] %v362
    // Predicated region
    $region22: #{positionwise_ffn.1} parent=1 // pred_check
      _
    $region23: #{positionwise_ffn.1} parent=1 // pred_check_branch
      %369 = sbr.rel (0) target = $region25
    $region24: #{positionwise_ffn.1} parent=1 // pred_region
      %s371 = ssub.s32 512, 512
      %372 = vsyncadd [#allocation3], %s371
      %s373 = sshll.u32 [#allocation2], 4
      %s374 = int_to_ptr.vmem [resolvable:$true] %s373
      %379 = dma.vmem_to_hbm [thread:$0]  %s374, 512, %s5, [#allocation3], 256, 256, 16
    $region25: #{positionwise_ffn.1} parent=1 // pred_fallthru
      _
    // Predicated region
    $region26: #{positionwise_ffn.1} parent=1 // pred_check
      _
    $region27: #{positionwise_ffn.1} parent=1 // pred_check_branch
      %381 = sbr.rel (0) target = $region29
    $region28: #{positionwise_ffn.1} parent=1 // pred_region
      %382 = dma.done [#allocation3], 512
    $region29: #{positionwise_ffn.1} parent=1 // pred_fallthru
      _
    %383 = vsyncpa [#allocation3], 1

</llo_original>
